<compile_context>
chip_gen: v7x
topology: tpu7x:2x2x1
jax: 0.10.0
libtpu: 0.0.40
codegen_flags: <defaults>
</compile_context>

<pallas_src>
import functools

import jax
import jax.numpy as jnp
from jax.experimental import pallas as pl
from jax.experimental.pallas import tpu as pltpu


def _sigmoid(x):
    # Mathematically exact sigmoid with a single EUP transcendental (tanh).
    return 0.5 * jnp.tanh(0.5 * x) + 0.5


def _neat_kernel(x_ref, w1_ref, b1_ref, w2_ref, b2_ref, o_ref):
    # Two MXU matmuls + EUP sigmoids; all operands resident in VMEM.
    x = x_ref[...]
    h = jnp.dot(x, w1_ref[...], preferred_element_type=jnp.float32) + b1_ref[...]
    h = _sigmoid(h)
    y = jnp.dot(h, w2_ref[...], preferred_element_type=jnp.float32) + b2_ref[...]
    y = _sigmoid(y)
    o_ref[...] = y.astype(o_ref.dtype)


@functools.partial(jax.jit, static_argnames=("block_b",))
def neat_net_forward(x, w1_t, b1, w2_t, b2, *, block_b=128):
    """Forward pass of NEATNet.

    x:    (B, in_size)          f32
    w1_t: (in_size, hidden)     f32  (transposed vs. PyTorch's (out, in))
    b1:   (1, hidden)           f32
    w2_t: (hidden, out_size)    f32
    b2:   (1, out_size)         f32
    """
    B, in_size = x.shape
    _, hidden = w1_t.shape
    out_size = w2_t.shape[1]

    grid = (pl.cdiv(B, block_b),)  # partial final batch block handled by Pallas

    return pl.pallas_call(
        _neat_kernel,
        out_shape=jax.ShapeDtypeStruct((B, out_size), jnp.float32),
        grid_spec=pltpu.PrefetchScalarGridSpec(
            num_scalar_prefetch=0,
            grid=grid,
            in_specs=[
                # x tiled over batch; last dim = full array dim (legal even if < 128).
                pl.BlockSpec((block_b, in_size), lambda i: (i, 0)),
                # Weights/biases: full-dim blocks, VMEM-resident across the grid.
                pl.BlockSpec((in_size, hidden), lambda i: (0, 0)),
                pl.BlockSpec((1, hidden), lambda i: (0, 0)),
                pl.BlockSpec((hidden, out_size), lambda i: (0, 0)),
                pl.BlockSpec((1, out_size), lambda i: (0, 0)),
            ],
            out_specs=pl.BlockSpec((block_b, out_size), lambda i: (i, 0)),
        ),
        compiler_params=pltpu.CompilerParams(
            dimension_semantics=("parallel",),  # v7x: split batch across both TCs
        ),
    )(x, w1_t, b1, w2_t, b2)


def init_params(key, input_size, hidden_size, output_size):
    # Deterministic init mimicking nn.Linear's U(-1/sqrt(fan_in), 1/sqrt(fan_in)).
    k1, k2, k3, k4 = jax.random.split(key, 4)
    bound1 = 1.0 / jnp.sqrt(jnp.float32(input_size))
    bound2 = 1.0 / jnp.sqrt(jnp.float32(hidden_size))
    # Stored as (in, out), i.e. already transposed vs. PyTorch's (out, in).
    w1_t = jax.random.uniform(k1, (input_size, hidden_size), jnp.float32, -bound1, bound1)
    b1 = jax.random.uniform(k2, (1, hidden_size), jnp.float32, -bound1, bound1)
    w2_t = jax.random.uniform(k3, (hidden_size, output_size), jnp.float32, -bound2, bound2)
    b2 = jax.random.uniform(k4, (1, output_size), jnp.float32, -bound2, bound2)
    return w1_t, b1, w2_t, b2


if __name__ == "__main__":
    input_size, hidden_size, output_size = 16, 32, 8
    batch = 200  # non-multiple of 128 -> exercises the partial final batch block

    key = jax.random.PRNGKey(0)
    kx, kp = jax.random.split(key)
    x = jax.random.normal(kx, (batch, input_size), jnp.float32)
    w1_t, b1, w2_t, b2 = init_params(kp, input_size, hidden_size, output_size)

    out = neat_net_forward(x, w1_t, b1, w2_t, b2)
    jax.block_until_ready(out)

    # Pure-JAX reference of the same semantics.
    ref = jax.nn.sigmoid(jax.nn.sigmoid(x @ w1_t + b1) @ w2_t + b2)
    assert out.shape == (batch, output_size)
    assert jnp.allclose(out, ref, atol=1e-5, rtol=1e-5), float(jnp.max(jnp.abs(out - ref)))

    print("KERNEL_OK")
</pallas_src>

<mosaic_0001>
module attributes {stable_mosaic.version = 11 : i64} {
  func.func @_neat_kernel(%arg0: i32, %arg1: memref<128x16xf32, #tpu.memory_space<vmem>>, %arg2: memref<16x32xf32, #tpu.memory_space<vmem>>, %arg3: memref<1x32xf32, #tpu.memory_space<vmem>>, %arg4: memref<32x8xf32, #tpu.memory_space<vmem>>, %arg5: memref<1x8xf32, #tpu.memory_space<vmem>>, %arg6: memref<128x8xf32, #tpu.memory_space<vmem>>) attributes {dimension_semantics = [#tpu.dimension_semantics<parallel>], iteration_bounds = array<i64: 2>, scalar_prefetch = 0 : i64, scratch_operands = 0 : i64, tpu.core_type = #tpu.core_type<tc>, window_params = [{transform_indices = @transform_0, window_bounds = array<i64: 128, 16>}, {pipeline_mode = #tpu.pipeline_mode<synchronous>, transform_indices = @transform_1, window_bounds = array<i64: 16, 32>}, {pipeline_mode = #tpu.pipeline_mode<synchronous>, transform_indices = @transform_2, window_bounds = array<i64: 1, 32>}, {pipeline_mode = #tpu.pipeline_mode<synchronous>, transform_indices = @transform_3, window_bounds = array<i64: 32, 8>}, {pipeline_mode = #tpu.pipeline_mode<synchronous>, transform_indices = @transform_4, window_bounds = array<i64: 1, 8>}, {transform_indices = @transform_5, window_bounds = array<i64: 128, 8>}]} {
    %c0 = arith.constant 0 : index
    %c0_0 = arith.constant 0 : index
    %0 = vector.load %arg1[%c0, %c0_0] : memref<128x16xf32, #tpu.memory_space<vmem>>, vector<128x16xf32>
    %c0_1 = arith.constant 0 : index
    %c0_2 = arith.constant 0 : index
    %1 = vector.load %arg2[%c0_1, %c0_2] : memref<16x32xf32, #tpu.memory_space<vmem>>, vector<16x32xf32>
    %cst = arith.constant dense<0.000000e+00> : vector<128x32xf32>
    %2 = tpu.matmul %0, %1, %cst {dimension_numbers = #tpu.dot_dimension_numbers<[1], [0], [0], [1], [0, 0, 1, 1], [], []>} : vector<128x16xf32>, vector<16x32xf32>, vector<128x32xf32> -> vector<128x32xf32>
    %c0_3 = arith.constant 0 : index
    %c0_4 = arith.constant 0 : index
    %3 = vector.load %arg3[%c0_3, %c0_4] : memref<1x32xf32, #tpu.memory_space<vmem>>, vector<1x32xf32>
    %4 = vector.broadcast %3 : vector<1x32xf32> to vector<128x32xf32>
    %5 = arith.addf %2, %4 : vector<128x32xf32>
    %cst_5 = arith.constant 5.000000e-01 : f32
    %6 = vector.broadcast %cst_5 : f32 to vector<128x32xf32>
    %7 = arith.mulf %6, %5 : vector<128x32xf32>
    %8 = math.tanh %7 : vector<128x32xf32>
    %cst_6 = arith.constant 5.000000e-01 : f32
    %9 = vector.broadcast %cst_6 : f32 to vector<128x32xf32>
    %10 = arith.mulf %9, %8 : vector<128x32xf32>
    %cst_7 = arith.constant 5.000000e-01 : f32
    %11 = vector.broadcast %cst_7 : f32 to vector<128x32xf32>
    %12 = arith.addf %10, %11 : vector<128x32xf32>
    %c0_8 = arith.constant 0 : index
    %c0_9 = arith.constant 0 : index
    %13 = vector.load %arg4[%c0_8, %c0_9] : memref<32x8xf32, #tpu.memory_space<vmem>>, vector<32x8xf32>
    %cst_10 = arith.constant dense<0.000000e+00> : vector<128x8xf32>
    %14 = tpu.matmul %12, %13, %cst_10 {dimension_numbers = #tpu.dot_dimension_numbers<[1], [0], [0], [1], [0, 0, 1, 1], [], []>} : vector<128x32xf32>, vector<32x8xf32>, vector<128x8xf32> -> vector<128x8xf32>
    %c0_11 = arith.constant 0 : index
    %c0_12 = arith.constant 0 : index
    %15 = vector.load %arg5[%c0_11, %c0_12] : memref<1x8xf32, #tpu.memory_space<vmem>>, vector<1x8xf32>
    %16 = vector.broadcast %15 : vector<1x8xf32> to vector<128x8xf32>
    %17 = arith.addf %14, %16 : vector<128x8xf32>
    %cst_13 = arith.constant 5.000000e-01 : f32
    %18 = vector.broadcast %cst_13 : f32 to vector<128x8xf32>
    %19 = arith.mulf %18, %17 : vector<128x8xf32>
    %20 = math.tanh %19 : vector<128x8xf32>
    %cst_14 = arith.constant 5.000000e-01 : f32
    %21 = vector.broadcast %cst_14 : f32 to vector<128x8xf32>
    %22 = arith.mulf %21, %20 : vector<128x8xf32>
    %cst_15 = arith.constant 5.000000e-01 : f32
    %23 = vector.broadcast %cst_15 : f32 to vector<128x8xf32>
    %24 = arith.addf %22, %23 : vector<128x8xf32>
    %c0_16 = arith.constant 0 : index
    %c0_17 = arith.constant 0 : index
    %25 = vector.load %arg6[%c0_16, %c0_17] : memref<128x8xf32, #tpu.memory_space<vmem>>, vector<128x8xf32>
    tpu.vector_store %arg6[%c0_16, %c0_17], %24 {strides = array<i32>} : memref<128x8xf32, #tpu.memory_space<vmem>>, vector<128x8xf32>,
    return
  }
  func.func @transform_0(%arg0: i32) -> (i32, i32) {
    %c0_i32 = arith.constant 0 : i32
    %c0_i32_0 = arith.constant 0 : i32
    return %arg0, %c0_i32 : i32, i32
  }
  func.func @transform_1(%arg0: i32) -> (i32, i32) {
    %c0_i32 = arith.constant 0 : i32
    %c0_i32_0 = arith.constant 0 : i32
    %c0_i32_1 = arith.constant 0 : i32
    return %c0_i32, %c0_i32_0 : i32, i32
  }
  func.func @transform_2(%arg0: i32) -> (i32, i32) {
    %c0_i32 = arith.constant 0 : i32
    %c0_i32_0 = arith.constant 0 : i32
    %c0_i32_1 = arith.constant 0 : i32
    return %c0_i32, %c0_i32_0 : i32, i32
  }
  func.func @transform_3(%arg0: i32) -> (i32, i32) {
    %c0_i32 = arith.constant 0 : i32
    %c0_i32_0 = arith.constant 0 : i32
    %c0_i32_1 = arith.constant 0 : i32
    return %c0_i32, %c0_i32_0 : i32, i32
  }
  func.func @transform_4(%arg0: i32) -> (i32, i32) {
    %c0_i32 = arith.constant 0 : i32
    %c0_i32_0 = arith.constant 0 : i32
    %c0_i32_1 = arith.constant 0 : i32
    return %c0_i32, %c0_i32_0 : i32, i32
  }
  func.func @transform_5(%arg0: i32) -> (i32, i32) {
    %c0_i32 = arith.constant 0 : i32
    %c0_i32_0 = arith.constant 0 : i32
    return %arg0, %c0_i32 : i32, i32
  }
}

</mosaic_0001>

<llo_original>
// kernel: neat_net_forward.1
$region0: #{neat_net_forward.1}
  #allocation0 [shape = 'u32[]', space=smem, size = 0x4, offset = 0x4, fixed_abs, tag = 'smem constant byte address 0x4 - core index']
  #allocation1 [shape = 'u32[144,128]{1,0:T(1,128)}', space=vmem, size = 0x12000, scoped, tag = 'internal scratch']
  %s0 = inlined_call_operand.vmem [shape: f32[200,16], index: 0, kind: input, shape index: {}]
  %s1 = inlined_call_operand.vmem [shape: f32[16,32], index: 1, kind: input, shape index: {}]
  %s2 = inlined_call_operand.vmem [shape: f32[1,32], index: 2, kind: input, shape index: {}]
  %s3 = inlined_call_operand.vmem [shape: f32[32,8], index: 3, kind: input, shape index: {}]
  %s4 = inlined_call_operand.vmem [shape: f32[1,8], index: 4, kind: input, shape index: {}]
  %s5 = inlined_call_operand.vmem [shape: f32[200,8], index: 5, kind: output, shape index: {}]
  %s6 = sld [smem:[#allocation0]]
  $region101: #{neat_net_forward.1} parent=0
    _
  %s8 = ssub.s32 1, %s6
  %s9 = scalar_select 0, %s8, %s6
  $region1: #{neat_net_forward.1} parent=0
    #allocation2 [shape = 'u8[131072]{0}', space=vmem, size = 0x20000, scoped, tag = 'output window, operand 0']
    loop: start=0, step=1, limit=4
    $region2: #{neat_net_forward.1} parent=1 // loop_pre_header
      _
    $region3: #{neat_net_forward.1} parent=1 // loop_header
      %s11 = sphi 0, %s15
      %p12 = scmp.ge.s32.totalorder %s11, 4
      %s21 = sphi 0, %s23
      %s24 = sphi 0, %s21
      %s25 = sphi 0, %s24
      %s41 = sphi 0, %s25
      %s45 = sphi 0, %s45
      %s47 = sphi 0, %s45
      %s48 = sphi 0, %s47
      %s62 = sphi 0, %s48
      %s66 = sphi 0, %s66
      %s68 = sphi 0, %s66
      %s69 = sphi 0, %s68
      %s83 = sphi 0, %s69
      %s87 = sphi 0, %s87
      %s89 = sphi 0, %s87
      %s90 = sphi 0, %s89
      %s104 = sphi 0, %s90
      %s108 = sphi 0, %s108
      %s110 = sphi 0, %s108
      %s111 = sphi 0, %s110
      %s125 = sphi 0, %s111
      %s131 = sphi 0, %s133
      %s134 = sphi 0, %s131
      %s135 = sphi 0, %s134
      %s151 = sphi 0, %s135
    $region4: #{neat_net_forward.1} parent=1 // loop_header_branch
      %14 = sbr.rel (%p12) target = $region8
    $region5: #{neat_net_forward.1} parent=1 // loop_body
      %s16 = ssub.s32 %s11, 1
      %s17 = ssub.s32 %s11, 2
      %s18 = sadd.s32 %s11, 1
      %s19 = ssub.s32 %s11, %s18
      %p20 = scmp.eq.s32.totalorder %s19, 0
      %s22 = sadd.s32 %s21, 1
      %s23 = scalar_select %p20, %s21, %s22
      %p26 = pneg %p20
      %p27 = scmp.eq.s32.totalorder %s11, 1
      %p28 = por %p26, %p27
      %p29 = scmp.ne.s32.totalorder %s21, %s24
      %p30 = scmp.eq.s32.totalorder %s11, 0
      %p31 = por %p29, %p30
      %p32 = scmp.ne.s32.totalorder %s21, %s24
      %p33 = scmp.eq.s32.totalorder %s16, 1
      %p34 = por %p32, %p33
      %p35 = scmp.ne.s32.totalorder %s24, %s25
      %p36 = scmp.eq.s32.totalorder %s16, 0
      %p37 = por %p35, %p36
      %p38 = scmp.ne.s32.totalorder %s24, %s25
      %p39 = scmp.eq.s32.totalorder %s17, 1
      %p40 = por %p38, %p39
      %p42 = scmp.ne.s32.totalorder %s25, %s41
      %p43 = scmp.eq.s32.totalorder %s17, 0
      %p44 = por %p42, %p43
      %s46 = sadd.s32 %s45, 1
      %p49 = scmp.eq.s32.totalorder %s11, 1
      %p50 = scmp.ne.s32.totalorder %s45, %s47
      %p51 = scmp.eq.s32.totalorder %s11, 0
      %p52 = por %p50, %p51
      %p53 = scmp.ne.s32.totalorder %s45, %s47
      %p54 = scmp.eq.s32.totalorder %s16, 1
      %p55 = por %p53, %p54
      %p56 = scmp.ne.s32.totalorder %s47, %s48
      %p57 = scmp.eq.s32.totalorder %s16, 0
      %p58 = por %p56, %p57
      %p59 = scmp.ne.s32.totalorder %s47, %s48
      %p60 = scmp.eq.s32.totalorder %s17, 1
      %p61 = por %p59, %p60
      %p63 = scmp.ne.s32.totalorder %s48, %s62
      %p64 = scmp.eq.s32.totalorder %s17, 0
      %p65 = por %p63, %p64
      %s67 = sadd.s32 %s66, 1
      %p70 = scmp.eq.s32.totalorder %s11, 1
      %p71 = scmp.ne.s32.totalorder %s66, %s68
      %p72 = scmp.eq.s32.totalorder %s11, 0
      %p73 = por %p71, %p72
      %p74 = scmp.ne.s32.totalorder %s66, %s68
      %p75 = scmp.eq.s32.totalorder %s16, 1
      %p76 = por %p74, %p75
      %p77 = scmp.ne.s32.totalorder %s68, %s69
      %p78 = scmp.eq.s32.totalorder %s16, 0
      %p79 = por %p77, %p78
      %p80 = scmp.ne.s32.totalorder %s68, %s69
      %p81 = scmp.eq.s32.totalorder %s17, 1
      %p82 = por %p80, %p81
      %p84 = scmp.ne.s32.totalorder %s69, %s83
      %p85 = scmp.eq.s32.totalorder %s17, 0
      %p86 = por %p84, %p85
      %s88 = sadd.s32 %s87, 1
      %p91 = scmp.eq.s32.totalorder %s11, 1
      %p92 = scmp.ne.s32.totalorder %s87, %s89
      %p93 = scmp.eq.s32.totalorder %s11, 0
      %p94 = por %p92, %p93
      %p95 = scmp.ne.s32.totalorder %s87, %s89
      %p96 = scmp.eq.s32.totalorder %s16, 1
      %p97 = por %p95, %p96
      %p98 = scmp.ne.s32.totalorder %s89, %s90
      %p99 = scmp.eq.s32.totalorder %s16, 0
      %p100 = por %p98, %p99
      %p101 = scmp.ne.s32.totalorder %s89, %s90
      %p102 = scmp.eq.s32.totalorder %s17, 1
      %p103 = por %p101, %p102
      %p105 = scmp.ne.s32.totalorder %s90, %s104
      %p106 = scmp.eq.s32.totalorder %s17, 0
      %p107 = por %p105, %p106
      %s109 = sadd.s32 %s108, 1
      %p112 = scmp.eq.s32.totalorder %s11, 1
      %p113 = scmp.ne.s32.totalorder %s108, %s110
      %p114 = scmp.eq.s32.totalorder %s11, 0
      %p115 = por %p113, %p114
      %p116 = scmp.ne.s32.totalorder %s108, %s110
      %p117 = scmp.eq.s32.totalorder %s16, 1
      %p118 = por %p116, %p117
      %p119 = scmp.ne.s32.totalorder %s110, %s111
      %p120 = scmp.eq.s32.totalorder %s16, 0
      %p121 = por %p119, %p120
      %p122 = scmp.ne.s32.totalorder %s110, %s111
      %p123 = scmp.eq.s32.totalorder %s17, 1
      %p124 = por %p122, %p123
      %p126 = scmp.ne.s32.totalorder %s111, %s125
      %p127 = scmp.eq.s32.totalorder %s17, 0
      %p128 = por %p126, %p127
      %s129 = ssub.s32 %s11, %s18
      %p130 = scmp.eq.s32.totalorder %s129, 0
      %s132 = sadd.s32 %s131, 1
      %s133 = scalar_select %p130, %s131, %s132
      %p136 = pneg %p130
      %p137 = scmp.eq.s32.totalorder %s11, 1
      %p138 = por %p136, %p137
      %p139 = scmp.ne.s32.totalorder %s131, %s134
      %p140 = scmp.eq.s32.totalorder %s11, 0
      %p141 = por %p139, %p140
      %p142 = scmp.ne.s32.totalorder %s131, %s134
      %p143 = scmp.eq.s32.totalorder %s16, 1
      %p144 = por %p142, %p143
      %p145 = scmp.ne.s32.totalorder %s134, %s135
      %p146 = scmp.eq.s32.totalorder %s16, 0
      %p147 = por %p145, %p146
      %p148 = scmp.ne.s32.totalorder %s134, %s135
      %p149 = scmp.eq.s32.totalorder %s17, 1
      %p150 = por %p148, %p149
      %p152 = scmp.ne.s32.totalorder %s135, %s151
      %p153 = scmp.eq.s32.totalorder %s17, 0
      %p154 = por %p152, %p153
      %p155 = scmp.le.s32.totalorder 1, %s11
      %p156 = scmp.lt.s32.totalorder %s11, 3
      %p157 = pnand %p155, %p156
      %p158 = pneg %p157
      // Predicated region
      $region9: #{neat_net_forward.1} parent=5 // pred_check
        _
      $region10: #{neat_net_forward.1} parent=5 // pred_check_branch
        %160 = sbr.rel (%p157) target = $region12
      $region11: #{neat_net_forward.1} parent=5 // pred_region
        %s161 = ssub.s32 %s11, 1
        // Predicated region
        $region13: #{neat_net_forward.1} parent=11 // pred_check
          %p162 = pneg %p58
        $region14: #{neat_net_forward.1} parent=11 // pred_check_branch
          %164 = sbr.rel (%p162) target = $region16
        $region15: #{neat_net_forward.1} parent=11 // pred_region
          _
        $region16: #{neat_net_forward.1} parent=11 // pred_fallthru
          _
        // Predicated region
        $region17: #{neat_net_forward.1} parent=11 // pred_check
          %p165 = pneg %p79
        $region18: #{neat_net_forward.1} parent=11 // pred_check_branch
          %167 = sbr.rel (%p165) target = $region20
        $region19: #{neat_net_forward.1} parent=11 // pred_region
          _
        $region20: #{neat_net_forward.1} parent=11 // pred_fallthru
          _
        // Predicated region
        $region21: #{neat_net_forward.1} parent=11 // pred_check
          %p168 = pneg %p100
        $region22: #{neat_net_forward.1} parent=11 // pred_check_branch
          %170 = sbr.rel (%p168) target = $region24
        $region23: #{neat_net_forward.1} parent=11 // pred_region
          _
        $region24: #{neat_net_forward.1} parent=11 // pred_fallthru
          _
        // Predicated region
        $region25: #{neat_net_forward.1} parent=11 // pred_check
          %p171 = pneg %p121
        $region26: #{neat_net_forward.1} parent=11 // pred_check_branch
          %173 = sbr.rel (%p171) target = $region28
        $region27: #{neat_net_forward.1} parent=11 // pred_region
          _
        $region28: #{neat_net_forward.1} parent=11 // pred_fallthru
          _
      $region12: #{neat_net_forward.1} parent=5 // pred_fallthru
        _
      %p174 = scmp.lt.s32.totalorder %s11, 2
      // Predicated region
      $region29: #{neat_net_forward.1} parent=5 // pred_check
        %p175 = pneg %p174
      $region30: #{neat_net_forward.1} parent=5 // pred_check_branch
        %177 = sbr.rel (%p175) target = $region32
      $region31: #{neat_net_forward.1} parent=5 // pred_region
        // Predicated region
        $region33: #{neat_net_forward.1} parent=31 // pred_check
          %p178 = pneg %p31
        $region34: #{neat_net_forward.1} parent=31 // pred_check_branch
          %180 = sbr.rel (%p178) target = $region36
        $region35: #{neat_net_forward.1} parent=31 // pred_region
          %s181 = smul.u32 16, %s11
          %s182 = ssub.s32 25, %s181
          %p183 = scmp.lt.s32.totalorder %s182, 16
          %s184 = scalar_select %p183, %s182, 16
          %s185 = smul.u32 128, %s184
          %p186 = scmp.lt.s32.totalorder %s181, 24
          %s187 = scalar_select %p186, %s181, 24
          %s188 = smul.addr %s187, 8
          %s189 = scalar_lea.vmem %s0, %s188
          %s190 = smul.u32 16, %s11
          %s191 = ssub.s32 25, %s190
          %p192 = scmp.lt.s32.totalorder %s191, 16
          %s193 = scalar_select %p192, %s191, 16
          %s194 = smul.u32 128, %s193
        $region36: #{neat_net_forward.1} parent=31 // pred_fallthru
          _
      $region32: #{neat_net_forward.1} parent=5 // pred_fallthru
        _
      %p195 = scmp.le.s32.totalorder 1, %s11
      %p196 = scmp.lt.s32.totalorder %s11, 3
      %p197 = pnand %p195, %p196
      %p198 = pneg %p197
      // Predicated region
      $region37: #{neat_net_forward.1} parent=5 // pred_check
        _
      $region38: #{neat_net_forward.1} parent=5 // pred_check_branch
        %200 = sbr.rel (%p197) target = $region40
      $region39: #{neat_net_forward.1} parent=5 // pred_region
        %s201 = ssub.s32 %s11, 1
        %s202 = smul.u32 16, %s16
        %s203 = ssub.s32 25, %s202
        %p204 = scmp.lt.s32.totalorder %s203, 16
        %s205 = scalar_select %p204, %s203, 16
        %s206 = smul.u32 128, %s205
        %p207 = scmp.lt.s32.totalorder %s202, 24
        %s208 = scalar_select %p207, %s202, 24
        %s209 = smul.addr %s208, 8
        %s210 = scalar_lea.vmem %s0, %s209
        %p211 = pneg %p37
        %p212 = pneg %p34
        %p213 = pneg %p58
        %p214 = pneg %p55
        %p215 = pneg %p79
        %p216 = pneg %p76
        %p217 = pneg %p100
        %p218 = pneg %p97
        %p219 = pneg %p121
        %p220 = pneg %p118
        %p221 = pneg %p147
        %p222 = pneg %p144
        %s223 = sand.u32 %s134, 1
        %s224 = sand.u32 %s134, 1
        %s225 = smul.addr %s224, 128
        %s226 = scalar_lea.vmem [#allocation2], %s225
        %s227 = smul.u32 16, %s16
        %s228 = ssub.s32 25, %s227
        %p229 = scmp.lt.s32.totalorder %s228, 16
        %s230 = scalar_select %p229, %s228, 16
        %s231 = smul.u32 128, %s230
        %p232 = scmp.lt.s32.totalorder %s227, 24
        %s233 = scalar_select %p232, %s227, 24
        %s234 = smul.addr %s233, 8
        %s235 = scalar_lea.vmem %s0, %s234
        %s236 = smul.u32 16, %s16
        %s237 = ssub.s32 25, %s236
        %p238 = scmp.lt.s32.totalorder %s237, 16
        %s239 = scalar_select %p238, %s237, 16
        %s240 = smul.u32 128, %s239
        %s241 = smul.u32 16, %s16
        %s242 = ssub.s32 25, %s241
        %p243 = scmp.lt.s32.totalorder %s242, 16
        %s244 = scalar_select %p243, %s242, 16
        %s245 = smul.u32 128, %s244
        %v246 = vld [vmem:[%s235] sm:$0xff]
        %v247 = vld [vmem:[%s235 + $0x8] sm:$0xff]
        %v248 = vld [vmem:[%s235 + $0x10] sm:$0xff]
        %v249 = vld [vmem:[%s235 + $0x18] sm:$0xff]
        %v250 = vld [vmem:[%s235 + $0x20] sm:$0xff]
        %v251 = vld [vmem:[%s235 + $0x28] sm:$0xff]
        %v252 = vld [vmem:[%s235 + $0x30] sm:$0xff]
        %v253 = vld [vmem:[%s235 + $0x38] sm:$0xff]
        %v254 = vld [vmem:[%s235 + $0x40] sm:$0xff]
        %v255 = vld [vmem:[%s235 + $0x48] sm:$0xff]
        %v256 = vld [vmem:[%s235 + $0x50] sm:$0xff]
        %v257 = vld [vmem:[%s235 + $0x58] sm:$0xff]
        %v258 = vld [vmem:[%s235 + $0x60] sm:$0xff]
        %v259 = vld [vmem:[%s235 + $0x68] sm:$0xff]
        %v260 = vld [vmem:[%s235 + $0x70] sm:$0xff]
        %v261 = vld [vmem:[%s235 + $0x78] sm:$0xff]
        %v262 = vld [vmem:[%s1] sm:$0xff]
        %v263 = vld [vmem:[%s1 + $0x8] sm:$0xff]
        %v264 = vld [vmem:[%s2] sm:$0x1]
        %v266 = vlaneseq
        %v267 = vshrl.u32 %v266, 7
        %v268 = vsub.s32 0, %v267
        %v269 = vrot.slane %v264, %v268
        %vm271 = vcmask 130048
        %v273 = vsel %vm271, %v246, 0
        %v276 = vsel %vm271, %v247, 0
        %v279 = vsel %vm271, %v248, 0
        %v282 = vsel %vm271, %v249, 0
        %v285 = vsel %vm271, %v250, 0
        %v288 = vsel %vm271, %v251, 0
        %v291 = vsel %vm271, %v252, 0
        %v294 = vsel %vm271, %v253, 0
        %v297 = vsel %vm271, %v254, 0
        %v300 = vsel %vm271, %v255, 0
        %v303 = vsel %vm271, %v256, 0
        %v306 = vsel %vm271, %v257, 0
        %v309 = vsel %vm271, %v258, 0
        %v312 = vsel %vm271, %v259, 0
        %v315 = vsel %vm271, %v260, 0
        %v318 = vsel %vm271, %v261, 0
        %320 = vmatprep.subr.mxu0 0.0
        %321 = vmatpush1.msra.mxu0 %v262
        %322 = vmatprep.subr.mxu0 0.0
        %323 = vmatpush1.msra.mxu0 %v263
        %324 = vmatprep.subr.mxu0 0.0
        %325 = vmatpush1.msra.mxu0 0.0
        %326 = vmatprep.subr.mxu0 0.0
        %327 = vmatpush1.msra.mxu0 0.0
        %328 = vmatprep.subr.mxu0 0.0
        %329 = vmatpush1.msra.mxu0 0.0
        %330 = vmatprep.subr.mxu0 0.0
        %331 = vmatpush1.msra.mxu0 0.0
        %332 = vmatprep.subr.mxu0 0.0
        %333 = vmatpush1.msra.mxu0 0.0
        %334 = vmatprep.subr.mxu0 0.0
        %335 = vmatpush1.msra.mxu0 0.0
        %336 = vmatprep.subr.mxu0 0.0
        %337 = vmatpush1.msra.mxu0 0.0
        %338 = vmatprep.subr.mxu0 0.0
        %339 = vmatpush1.msra.mxu0 0.0
        %340 = vmatprep.subr.mxu0 0.0
        %341 = vmatpush1.msra.mxu0 0.0
        %342 = vmatprep.subr.mxu0 0.0
        %343 = vmatpush1.msra.mxu0 0.0
        %344 = vmatprep.subr.mxu0 0.0
        %345 = vmatpush1.msra.mxu0 0.0
        %346 = vmatprep.subr.mxu0 0.0
        %347 = vmatpush1.msra.mxu0 0.0
        %348 = vmatprep.subr.mxu0 0.0
        %349 = vmatpush1.msra.mxu0 0.0
        %350 = vmatprep.subr.mxu0 0.0
        %351 = vmatpush1.msra.mxu0 0.0
        %352 = vmatprep.subr.mxu0 0.0
        %353 = vmatpush1.msra.mxu0 0.0
        %354 = vmatprep.subr.mxu0 0.0
        %355 = vmatpush1.msra.mxu0 0.0
        %356 = vmatprep.subr.mxu0 0.0
        %357 = vmatpush1.msra.mxu0 0.0
        %358 = vmatprep.subr.mxu0 0.0
        %359 = vmatpush1.msra.mxu0 0.0
        %360 = vmatprep.subr.mxu0 0.0
        %361 = vmatpush1.msra.mxu0 0.0
        %362 = vmatprep.subr.mxu0 0.0
        %363 = vmatpush1.msra.mxu0 0.0
        %364 = vmatprep.subr.mxu0 0.0
        %365 = vmatpush1.msra.mxu0 0.0
        %366 = vmatprep.subr.mxu0 0.0
        %367 = vmatpush1.msra.mxu0 0.0
        %368 = vmatprep.subr.mxu0 0.0
        %369 = vmatpush1.msra.mxu0 0.0
        %370 = vmatprep.subr.mxu0 0.0
        %371 = vmatpush1.msra.mxu0 0.0
        %372 = vmatprep.subr.mxu0 0.0
        %373 = vmatpush1.msra.mxu0 0.0
        %374 = vmatprep.subr.mxu0 0.0
        %375 = vmatpush1.msra.mxu0 0.0
        %376 = vmatprep.subr.mxu0 0.0
        %377 = vmatpush1.msra.mxu0 0.0
        %378 = vmatprep.subr.mxu0 0.0
        %379 = vmatpush1.msra.mxu0 0.0
        %380 = vmatprep.subr.mxu0 0.0
        %381 = vmatpush1.msra.mxu0 0.0
        %382 = vmatprep.subr.mxu0 0.0
        %383 = vmatpush1.msra.mxu0 0.0
        %384 = vmatprep.mubr.f32.mxu0 0.0
        %385 = vmatmul.mubr.f32.gmra.mrb[0].mxu0 %v273
        %v386 = vpop.f32.mrb[0].mxu0
        %v387 = vadd.f32 %v269, %v386
        %v388 = vpop.f32.mrb[0].mxu0
        %389 = vmatprep.mubr.f32.mxu0 0.0
        %390 = vmatmul.mubr.f32.gmra.mrb[0].mxu0 %v276
        %v391 = vpop.f32.mrb[0].mxu0
        %v392 = vadd.f32 %v269, %v391
        %v393 = vpop.f32.mrb[0].mxu0
        %394 = vmatprep.mubr.f32.mxu0 0.0
        %395 = vmatmul.mubr.f32.gmra.mrb[0].mxu0 %v279
        %v396 = vpop.f32.mrb[0].mxu0
        %v397 = vadd.f32 %v269, %v396
        %v398 = vpop.f32.mrb[0].mxu0
        %399 = vmatprep.mubr.f32.mxu0 0.0
        %400 = vmatmul.mubr.f32.gmra.mrb[0].mxu0 %v282
        %v401 = vpop.f32.mrb[0].mxu0
        %v402 = vadd.f32 %v269, %v401
        %v403 = vpop.f32.mrb[0].mxu0
        %404 = vmatprep.mubr.f32.mxu0 0.0
        %405 = vmatmul.mubr.f32.gmra.mrb[0].mxu0 %v285
        %v406 = vpop.f32.mrb[0].mxu0
        %v407 = vadd.f32 %v269, %v406
        %v408 = vpop.f32.mrb[0].mxu0
        %409 = vmatprep.mubr.f32.mxu0 0.0
        %410 = vmatmul.mubr.f32.gmra.mrb[0].mxu0 %v288
        %v411 = vpop.f32.mrb[0].mxu0
        %v412 = vadd.f32 %v269, %v411
        %v413 = vpop.f32.mrb[0].mxu0
        %414 = vmatprep.mubr.f32.mxu0 0.0
        %415 = vmatmul.mubr.f32.gmra.mrb[0].mxu0 %v291
        %v416 = vpop.f32.mrb[0].mxu0
        %v417 = vadd.f32 %v269, %v416
        %v418 = vpop.f32.mrb[0].mxu0
        %419 = vmatprep.mubr.f32.mxu0 0.0
        %420 = vmatmul.mubr.f32.gmra.mrb[0].mxu0 %v294
        %v421 = vpop.f32.mrb[0].mxu0
        %v422 = vadd.f32 %v269, %v421
        %v423 = vpop.f32.mrb[0].mxu0
        %424 = vmatprep.mubr.f32.mxu0 0.0
        %425 = vmatmul.mubr.f32.gmra.mrb[0].mxu0 %v297
        %v426 = vpop.f32.mrb[0].mxu0
        %v427 = vadd.f32 %v269, %v426
        %v428 = vpop.f32.mrb[0].mxu0
        %429 = vmatprep.mubr.f32.mxu0 0.0
        %430 = vmatmul.mubr.f32.gmra.mrb[0].mxu0 %v300
        %v431 = vpop.f32.mrb[0].mxu0
        %v432 = vadd.f32 %v269, %v431
        %v433 = vpop.f32.mrb[0].mxu0
        %434 = vmatprep.mubr.f32.mxu0 0.0
        %435 = vmatmul.mubr.f32.gmra.mrb[0].mxu0 %v303
        %v436 = vpop.f32.mrb[0].mxu0
        %v437 = vadd.f32 %v269, %v436
        %v438 = vpop.f32.mrb[0].mxu0
        %439 = vmatprep.mubr.f32.mxu0 0.0
        %440 = vmatmul.mubr.f32.gmra.mrb[0].mxu0 %v306
        %v441 = vpop.f32.mrb[0].mxu0
        %v442 = vadd.f32 %v269, %v441
        %v443 = vpop.f32.mrb[0].mxu0
        %444 = vmatprep.mubr.f32.mxu0 0.0
        %445 = vmatmul.mubr.f32.gmra.mrb[0].mxu0 %v309
        %v446 = vpop.f32.mrb[0].mxu0
        %v447 = vadd.f32 %v269, %v446
        %v448 = vpop.f32.mrb[0].mxu0
        %449 = vmatprep.mubr.f32.mxu0 0.0
        %450 = vmatmul.mubr.f32.gmra.mrb[0].mxu0 %v312
        %v451 = vpop.f32.mrb[0].mxu0
        %v452 = vadd.f32 %v269, %v451
        %v453 = vpop.f32.mrb[0].mxu0
        %454 = vmatprep.mubr.f32.mxu0 0.0
        %455 = vmatmul.mubr.f32.gmra.mrb[0].mxu0 %v315
        %v456 = vpop.f32.mrb[0].mxu0
        %v457 = vadd.f32 %v269, %v456
        %v458 = vpop.f32.mrb[0].mxu0
        %459 = vmatprep.mubr.f32.mxu0 0.0
        %460 = vmatmul.mubr.f32.gmra.mrb[0].mxu0 %v318
        %v461 = vpop.f32.mrb[0].mxu0
        %v462 = vadd.f32 %v269, %v461
        %v463 = vpop.f32.mrb[0].mxu0
        %464 = vdwg.mxu0
        %v465 = vmul.f32 %v387, 0.5
        %v466 = vmul.f32 %v392, 0.5
        %v467 = vmul.f32 %v397, 0.5
        %v468 = vmul.f32 %v402, 0.5
        %v469 = vmul.f32 %v407, 0.5
        %v470 = vmul.f32 %v412, 0.5
        %v471 = vmul.f32 %v417, 0.5
        %v472 = vmul.f32 %v422, 0.5
        %v473 = vmul.f32 %v427, 0.5
        %v474 = vmul.f32 %v432, 0.5
        %v475 = vmul.f32 %v437, 0.5
        %v476 = vmul.f32 %v442, 0.5
        %v477 = vmul.f32 %v447, 0.5
        %v478 = vmul.f32 %v452, 0.5
        %v479 = vmul.f32 %v457, 0.5
        %v480 = vmul.f32 %v462, 0.5
        %v481 = vtanh.pop %v465
        %v482 = vtanh.pop %v466
        %v483 = vtanh.pop %v467
        %v484 = vtanh.pop %v468
        %v485 = vtanh.pop %v469
        %v486 = vtanh.pop %v470
        %v487 = vtanh.pop %v471
        %v488 = vtanh.pop %v472
        %v489 = vtanh.pop %v473
        %v490 = vtanh.pop %v474
        %v491 = vtanh.pop %v475
        %v492 = vtanh.pop %v476
        %v493 = vtanh.pop %v477
        %v494 = vtanh.pop %v478
        %v495 = vtanh.pop %v479
        %v496 = vtanh.pop %v480
        %v497 = vmul.f32 %v481, 0.5
        %v498 = vmul.f32 %v482, 0.5
        %v499 = vmul.f32 %v483, 0.5
        %v500 = vmul.f32 %v484, 0.5
        %v501 = vmul.f32 %v485, 0.5
        %v502 = vmul.f32 %v486, 0.5
        %v503 = vmul.f32 %v487, 0.5
        %v504 = vmul.f32 %v488, 0.5
        %v505 = vmul.f32 %v489, 0.5
        %v506 = vmul.f32 %v490, 0.5
        %v507 = vmul.f32 %v491, 0.5
        %v508 = vmul.f32 %v492, 0.5
        %v509 = vmul.f32 %v493, 0.5
        %v510 = vmul.f32 %v494, 0.5
        %v511 = vmul.f32 %v495, 0.5
        %v512 = vmul.f32 %v496, 0.5
        %v513 = vadd.f32 %v497, 0.5
        %v514 = vadd.f32 %v498, 0.5
        %v515 = vadd.f32 %v499, 0.5
        %v516 = vadd.f32 %v500, 0.5
        %v517 = vadd.f32 %v501, 0.5
        %v518 = vadd.f32 %v502, 0.5
        %v519 = vadd.f32 %v503, 0.5
        %v520 = vadd.f32 %v504, 0.5
        %v521 = vadd.f32 %v505, 0.5
        %v522 = vadd.f32 %v506, 0.5
        %v523 = vadd.f32 %v507, 0.5
        %v524 = vadd.f32 %v508, 0.5
        %v525 = vadd.f32 %v509, 0.5
        %v526 = vadd.f32 %v510, 0.5
        %v527 = vadd.f32 %v511, 0.5
        %v528 = vadd.f32 %v512, 0.5
        %v529 = vld [vmem:[%s3] sm:$0xff]
        %v530 = vld [vmem:[%s3 + $0x8] sm:$0xff]
        %v531 = vld [vmem:[%s3 + $0x10] sm:$0xff]
        %v532 = vld [vmem:[%s3 + $0x18] sm:$0xff]
        %v533 = vld [vmem:[%s4] sm:$0x1]
        %v535 = vlaneseq
        %v536 = vshrl.u32 %v535, 7
        %v537 = vsub.s32 0, %v536
        %v538 = vrot.slane %v533, %v537
        %vm540 = vcmask 261120
        %v542 = vsel %vm540, %v513, 0
        %v545 = vsel %vm540, %v514, 0
        %v548 = vsel %vm540, %v515, 0
        %v551 = vsel %vm540, %v516, 0
        %v554 = vsel %vm540, %v517, 0
        %v557 = vsel %vm540, %v518, 0
        %v560 = vsel %vm540, %v519, 0
        %v563 = vsel %vm540, %v520, 0
        %v566 = vsel %vm540, %v521, 0
        %v569 = vsel %vm540, %v522, 0
        %v572 = vsel %vm540, %v523, 0
        %v575 = vsel %vm540, %v524, 0
        %v578 = vsel %vm540, %v525, 0
        %v581 = vsel %vm540, %v526, 0
        %v584 = vsel %vm540, %v527, 0
        %v587 = vsel %vm540, %v528, 0
        %589 = vmatprep.subr.mxu0 0.0
        %590 = vmatpush1.msra.mxu0 %v529
        %591 = vmatprep.subr.mxu0 0.0
        %592 = vmatpush1.msra.mxu0 %v530
        %593 = vmatprep.subr.mxu0 0.0
        %594 = vmatpush1.msra.mxu0 %v531
        %595 = vmatprep.subr.mxu0 0.0
        %596 = vmatpush1.msra.mxu0 %v532
        %597 = vmatprep.subr.mxu0 0.0
        %598 = vmatpush1.msra.mxu0 0.0
        %599 = vmatprep.subr.mxu0 0.0
        %600 = vmatpush1.msra.mxu0 0.0
        %601 = vmatprep.subr.mxu0 0.0
        %602 = vmatpush1.msra.mxu0 0.0
        %603 = vmatprep.subr.mxu0 0.0
        %604 = vmatpush1.msra.mxu0 0.0
        %605 = vmatprep.subr.mxu0 0.0
        %606 = vmatpush1.msra.mxu0 0.0
        %607 = vmatprep.subr.mxu0 0.0
        %608 = vmatpush1.msra.mxu0 0.0
        %609 = vmatprep.subr.mxu0 0.0
        %610 = vmatpush1.msra.mxu0 0.0
        %611 = vmatprep.subr.mxu0 0.0
        %612 = vmatpush1.msra.mxu0 0.0
        %613 = vmatprep.subr.mxu0 0.0
        %614 = vmatpush1.msra.mxu0 0.0
        %615 = vmatprep.subr.mxu0 0.0
        %616 = vmatpush1.msra.mxu0 0.0
        %617 = vmatprep.subr.mxu0 0.0
        %618 = vmatpush1.msra.mxu0 0.0
        %619 = vmatprep.subr.mxu0 0.0
        %620 = vmatpush1.msra.mxu0 0.0
        %621 = vmatprep.subr.mxu0 0.0
        %622 = vmatpush1.msra.mxu0 0.0
        %623 = vmatprep.subr.mxu0 0.0
        %624 = vmatpush1.msra.mxu0 0.0
        %625 = vmatprep.subr.mxu0 0.0
        %626 = vmatpush1.msra.mxu0 0.0
        %627 = vmatprep.subr.mxu0 0.0
        %628 = vmatpush1.msra.mxu0 0.0
        %629 = vmatprep.subr.mxu0 0.0
        %630 = vmatpush1.msra.mxu0 0.0
        %631 = vmatprep.subr.mxu0 0.0
        %632 = vmatpush1.msra.mxu0 0.0
        %633 = vmatprep.subr.mxu0 0.0
        %634 = vmatpush1.msra.mxu0 0.0
        %635 = vmatprep.subr.mxu0 0.0
        %636 = vmatpush1.msra.mxu0 0.0
        %637 = vmatprep.subr.mxu0 0.0
        %638 = vmatpush1.msra.mxu0 0.0
        %639 = vmatprep.subr.mxu0 0.0
        %640 = vmatpush1.msra.mxu0 0.0
        %641 = vmatprep.subr.mxu0 0.0
        %642 = vmatpush1.msra.mxu0 0.0
        %643 = vmatprep.subr.mxu0 0.0
        %644 = vmatpush1.msra.mxu0 0.0
        %645 = vmatprep.subr.mxu0 0.0
        %646 = vmatpush1.msra.mxu0 0.0
        %647 = vmatprep.subr.mxu0 0.0
        %648 = vmatpush1.msra.mxu0 0.0
        %649 = vmatprep.subr.mxu0 0.0
        %650 = vmatpush1.msra.mxu0 0.0
        %651 = vmatprep.subr.mxu0 0.0
        %652 = vmatpush1.msra.mxu0 0.0
        %653 = vmatprep.mubr.f32.mxu0 0.0
        %654 = vmatmul.mubr.f32.gmra.mrb[0].mxu0 %v542
        %v655 = vpop.f32.mrb[0].mxu0
        %v656 = vadd.f32 %v538, %v655
        %v657 = vpop.f32.mrb[0].mxu0
        %658 = vmatprep.mubr.f32.mxu0 0.0
        %659 = vmatmul.mubr.f32.gmra.mrb[0].mxu0 %v545
        %v660 = vpop.f32.mrb[0].mxu0
        %v661 = vadd.f32 %v538, %v660
        %v662 = vpop.f32.mrb[0].mxu0
        %663 = vmatprep.mubr.f32.mxu0 0.0
        %664 = vmatmul.mubr.f32.gmra.mrb[0].mxu0 %v548
        %v665 = vpop.f32.mrb[0].mxu0
        %v666 = vadd.f32 %v538, %v665
        %v667 = vpop.f32.mrb[0].mxu0
        %668 = vmatprep.mubr.f32.mxu0 0.0
        %669 = vmatmul.mubr.f32.gmra.mrb[0].mxu0 %v551
        %v670 = vpop.f32.mrb[0].mxu0
        %v671 = vadd.f32 %v538, %v670
        %v672 = vpop.f32.mrb[0].mxu0
        %673 = vmatprep.mubr.f32.mxu0 0.0
        %674 = vmatmul.mubr.f32.gmra.mrb[0].mxu0 %v554
        %v675 = vpop.f32.mrb[0].mxu0
        %v676 = vadd.f32 %v538, %v675
        %v677 = vpop.f32.mrb[0].mxu0
        %678 = vmatprep.mubr.f32.mxu0 0.0
        %679 = vmatmul.mubr.f32.gmra.mrb[0].mxu0 %v557
        %v680 = vpop.f32.mrb[0].mxu0
        %v681 = vadd.f32 %v538, %v680
        %v682 = vpop.f32.mrb[0].mxu0
        %683 = vmatprep.mubr.f32.mxu0 0.0
        %684 = vmatmul.mubr.f32.gmra.mrb[0].mxu0 %v560
        %v685 = vpop.f32.mrb[0].mxu0
        %v686 = vadd.f32 %v538, %v685
        %v687 = vpop.f32.mrb[0].mxu0
        %688 = vmatprep.mubr.f32.mxu0 0.0
        %689 = vmatmul.mubr.f32.gmra.mrb[0].mxu0 %v563
        %v690 = vpop.f32.mrb[0].mxu0
        %v691 = vadd.f32 %v538, %v690
        %v692 = vpop.f32.mrb[0].mxu0
        %693 = vmatprep.mubr.f32.mxu0 0.0
        %694 = vmatmul.mubr.f32.gmra.mrb[0].mxu0 %v566
        %v695 = vpop.f32.mrb[0].mxu0
        %v696 = vadd.f32 %v538, %v695
        %v697 = vpop.f32.mrb[0].mxu0
        %698 = vmatprep.mubr.f32.mxu0 0.0
        %699 = vmatmul.mubr.f32.gmra.mrb[0].mxu0 %v569
        %v700 = vpop.f32.mrb[0].mxu0
        %v701 = vadd.f32 %v538, %v700
        %v702 = vpop.f32.mrb[0].mxu0
        %703 = vmatprep.mubr.f32.mxu0 0.0
        %704 = vmatmul.mubr.f32.gmra.mrb[0].mxu0 %v572
        %v705 = vpop.f32.mrb[0].mxu0
        %v706 = vadd.f32 %v538, %v705
        %v707 = vpop.f32.mrb[0].mxu0
        %708 = vmatprep.mubr.f32.mxu0 0.0
        %709 = vmatmul.mubr.f32.gmra.mrb[0].mxu0 %v575
        %v710 = vpop.f32.mrb[0].mxu0
        %v711 = vadd.f32 %v538, %v710
        %v712 = vpop.f32.mrb[0].mxu0
        %713 = vmatprep.mubr.f32.mxu0 0.0
        %714 = vmatmul.mubr.f32.gmra.mrb[0].mxu0 %v578
        %v715 = vpop.f32.mrb[0].mxu0
        %v716 = vadd.f32 %v538, %v715
        %v717 = vpop.f32.mrb[0].mxu0
        %718 = vmatprep.mubr.f32.mxu0 0.0
        %719 = vmatmul.mubr.f32.gmra.mrb[0].mxu0 %v581
        %v720 = vpop.f32.mrb[0].mxu0
        %v721 = vadd.f32 %v538, %v720
        %v722 = vpop.f32.mrb[0].mxu0
        %723 = vmatprep.mubr.f32.mxu0 0.0
        %724 = vmatmul.mubr.f32.gmra.mrb[0].mxu0 %v584
        %v725 = vpop.f32.mrb[0].mxu0
        %v726 = vadd.f32 %v538, %v725
        %v727 = vpop.f32.mrb[0].mxu0
        %728 = vmatprep.mubr.f32.mxu0 0.0
        %729 = vmatmul.mubr.f32.gmra.mrb[0].mxu0 %v587
        %v730 = vpop.f32.mrb[0].mxu0
        %v731 = vadd.f32 %v538, %v730
        %v732 = vpop.f32.mrb[0].mxu0
        %733 = vdwg.mxu0
        %v734 = vmul.f32 %v656, 0.5
        %v735 = vmul.f32 %v661, 0.5
        %v736 = vmul.f32 %v666, 0.5
        %v737 = vmul.f32 %v671, 0.5
        %v738 = vmul.f32 %v676, 0.5
        %v739 = vmul.f32 %v681, 0.5
        %v740 = vmul.f32 %v686, 0.5
        %v741 = vmul.f32 %v691, 0.5
        %v742 = vmul.f32 %v696, 0.5
        %v743 = vmul.f32 %v701, 0.5
        %v744 = vmul.f32 %v706, 0.5
        %v745 = vmul.f32 %v711, 0.5
        %v746 = vmul.f32 %v716, 0.5
        %v747 = vmul.f32 %v721, 0.5
        %v748 = vmul.f32 %v726, 0.5
        %v749 = vmul.f32 %v731, 0.5
        %v750 = vtanh.pop %v734
        %v751 = vtanh.pop %v735
        %v752 = vtanh.pop %v736
        %v753 = vtanh.pop %v737
        %v754 = vtanh.pop %v738
        %v755 = vtanh.pop %v739
        %v756 = vtanh.pop %v740
        %v757 = vtanh.pop %v741
        %v758 = vtanh.pop %v742
        %v759 = vtanh.pop %v743
        %v760 = vtanh.pop %v744
        %v761 = vtanh.pop %v745
        %v762 = vtanh.pop %v746
        %v763 = vtanh.pop %v747
        %v764 = vtanh.pop %v748
        %v765 = vtanh.pop %v749
        %v766 = vmul.f32 %v750, 0.5
        %v767 = vmul.f32 %v751, 0.5
        %v768 = vmul.f32 %v752, 0.5
        %v769 = vmul.f32 %v753, 0.5
        %v770 = vmul.f32 %v754, 0.5
        %v771 = vmul.f32 %v755, 0.5
        %v772 = vmul.f32 %v756, 0.5
        %v773 = vmul.f32 %v757, 0.5
        %v774 = vmul.f32 %v758, 0.5
        %v775 = vmul.f32 %v759, 0.5
        %v776 = vmul.f32 %v760, 0.5
        %v777 = vmul.f32 %v761, 0.5
        %v778 = vmul.f32 %v762, 0.5
        %v779 = vmul.f32 %v763, 0.5
        %v780 = vmul.f32 %v764, 0.5
        %v781 = vmul.f32 %v765, 0.5
        %v782 = vadd.f32 %v766, 0.5
        %v783 = vadd.f32 %v767, 0.5
        %v784 = vadd.f32 %v768, 0.5
        %v785 = vadd.f32 %v769, 0.5
        %v786 = vadd.f32 %v770, 0.5
        %v787 = vadd.f32 %v771, 0.5
        %v788 = vadd.f32 %v772, 0.5
        %v789 = vadd.f32 %v773, 0.5
        %v790 = vadd.f32 %v774, 0.5
        %v791 = vadd.f32 %v775, 0.5
        %v792 = vadd.f32 %v776, 0.5
        %v793 = vadd.f32 %v777, 0.5
        %v794 = vadd.f32 %v778, 0.5
        %v795 = vadd.f32 %v779, 0.5
        %v796 = vadd.f32 %v780, 0.5
        %v797 = vadd.f32 %v781, 0.5
        %vm798 = vcmask 64512
        %799 = vst.msk [vmem:[%s226] sm:$0xff] %vm798, %v782
        %800 = vst.msk [vmem:[%s226 + $0x8] sm:$0xff] %vm798, %v783
        %801 = vst.msk [vmem:[%s226 + $0x10] sm:$0xff] %vm798, %v784
        %802 = vst.msk [vmem:[%s226 + $0x18] sm:$0xff] %vm798, %v785
        %803 = vst.msk [vmem:[%s226 + $0x20] sm:$0xff] %vm798, %v786
        %804 = vst.msk [vmem:[%s226 + $0x28] sm:$0xff] %vm798, %v787
        %805 = vst.msk [vmem:[%s226 + $0x30] sm:$0xff] %vm798, %v788
        %806 = vst.msk [vmem:[%s226 + $0x38] sm:$0xff] %vm798, %v789
        %807 = vst.msk [vmem:[%s226 + $0x40] sm:$0xff] %vm798, %v790
        %808 = vst.msk [vmem:[%s226 + $0x48] sm:$0xff] %vm798, %v791
        %809 = vst.msk [vmem:[%s226 + $0x50] sm:$0xff] %vm798, %v792
        %810 = vst.msk [vmem:[%s226 + $0x58] sm:$0xff] %vm798, %v793
        %811 = vst.msk [vmem:[%s226 + $0x60] sm:$0xff] %vm798, %v794
        %812 = vst.msk [vmem:[%s226 + $0x68] sm:$0xff] %vm798, %v795
        %813 = vst.msk [vmem:[%s226 + $0x70] sm:$0xff] %vm798, %v796
        %814 = vst.msk [vmem:[%s226 + $0x78] sm:$0xff] %vm798, %v797
        %s815 = sand.u32 %s134, 1
        %s816 = sand.u32 %s134, 1
        %s817 = smul.addr %s816, 128
        %s818 = scalar_lea.vmem [#allocation2], %s817
        // Predicated region
        $region41: #{neat_net_forward.1} parent=39 // pred_check
          %p819 = pneg %p144
        $region42: #{neat_net_forward.1} parent=39 // pred_check_branch
          %821 = sbr.rel (%p819) target = $region44
        $region43: #{neat_net_forward.1} parent=39 // pred_region
          %s822 = smul.u32 16, %s16
          %s823 = ssub.s32 25, %s822
          %p824 = scmp.lt.s32.totalorder %s823, 16
          %s825 = scalar_select %p824, %s823, 16
          %s826 = smul.u32 128, %s825
          %p827 = scmp.ne.s32.totalorder 0, %s826
          %s828 = smul.addr %s822, 8
          %s829 = scalar_lea.vmem %s5, %s828
          // Predicated region
          $region45: #{neat_net_forward.1} parent=43 // pred_check
            %p830 = pneg %p827
          $region46: #{neat_net_forward.1} parent=43 // pred_check_branch
            %832 = sbr.rel (%p830) target = $region48
          $region47: #{neat_net_forward.1} parent=43 // pred_region
            // Predicated region
            $region49: #{neat_net_forward.1} parent=47 // pred_check
              _
            $region50: #{neat_net_forward.1} parent=47 // pred_check_branch
              %834 = sbr.rel (0) target = $region52
            $region51: #{neat_net_forward.1} parent=47 // pred_region
              // Predicated region
              $region71: #{neat_net_forward.1} parent=51 // pred_check
                _
              $region72: #{neat_net_forward.1} parent=51 // pred_check_branch
                %913 = sbr.rel (0) target = $region74
              $region73: #{neat_net_forward.1} parent=51 // pred_region
                %s914 = sshrl.u32 %s825, 4
                // While loop
                $region75: #{neat_net_forward.1} parent=73 // loop_pre_header
                  _
                $region76: #{neat_net_forward.1} parent=73 // loop_header
                  %s916 = sphi 0, %s918
                  %p917 = scmp.ge.s32.totalorder %s916, %s914
                  %s921 = sphi 0, %s958
                  %s922 = sphi %s818, %s961
                  %s923 = sphi %s829, %s962
                $region77: #{neat_net_forward.1} parent=73 // loop_header_branch
                  %920 = sbr.rel (%p917) target = $region81
                $region78: #{neat_net_forward.1} parent=73 // loop_body
                  %v924 = vld [vmem:[%s922] sm:$0xff]
                  %925 = vst [vmem:[%s923] sm:$0xff] %v924
                  %v926 = vld [vmem:[%s922 + $0x8] sm:$0xff]
                  %927 = vst [vmem:[%s923 + $0x8] sm:$0xff] %v926
                  %v928 = vld [vmem:[%s922 + $0x10] sm:$0xff]
                  %929 = vst [vmem:[%s923 + $0x10] sm:$0xff] %v928
                  %v930 = vld [vmem:[%s922 + $0x18] sm:$0xff]
                  %931 = vst [vmem:[%s923 + $0x18] sm:$0xff] %v930
                  %v932 = vld [vmem:[%s922 + $0x20] sm:$0xff]
                  %933 = vst [vmem:[%s923 + $0x20] sm:$0xff] %v932
                  %v934 = vld [vmem:[%s922 + $0x28] sm:$0xff]
                  %935 = vst [vmem:[%s923 + $0x28] sm:$0xff] %v934
                  %v936 = vld [vmem:[%s922 + $0x30] sm:$0xff]
                  %937 = vst [vmem:[%s923 + $0x30] sm:$0xff] %v936
                  %v938 = vld [vmem:[%s922 + $0x38] sm:$0xff]
                  %939 = vst [vmem:[%s923 + $0x38] sm:$0xff] %v938
                  %v940 = vld [vmem:[%s922 + $0x40] sm:$0xff]
                  %941 = vst [vmem:[%s923 + $0x40] sm:$0xff] %v940
                  %v942 = vld [vmem:[%s922 + $0x48] sm:$0xff]
                  %943 = vst [vmem:[%s923 + $0x48] sm:$0xff] %v942
                  %v944 = vld [vmem:[%s922 + $0x50] sm:$0xff]
                  %945 = vst [vmem:[%s923 + $0x50] sm:$0xff] %v944
                  %v946 = vld [vmem:[%s922 + $0x58] sm:$0xff]
                  %947 = vst [vmem:[%s923 + $0x58] sm:$0xff] %v946
                  %v948 = vld [vmem:[%s922 + $0x60] sm:$0xff]
                  %949 = vst [vmem:[%s923 + $0x60] sm:$0xff] %v948
                  %v950 = vld [vmem:[%s922 + $0x68] sm:$0xff]
                  %951 = vst [vmem:[%s923 + $0x68] sm:$0xff] %v950
                  %v952 = vld [vmem:[%s922 + $0x70] sm:$0xff]
                  %953 = vst [vmem:[%s923 + $0x70] sm:$0xff] %v952
                  %v954 = vld [vmem:[%s922 + $0x78] sm:$0xff]
                  %955 = vst [vmem:[%s923 + $0x78] sm:$0xff] %v954
                  %s956 = sadd.s32 1, %s921
                  %p957 = scmp.ge.s32.totalorder %s956, %s914
                  %s958 = scalar_select %p957, 0, %s956
                  %s959 = smul.u32 %s958, 128
                  %s960 = smul.u32 %s958, 128
                  %s961 = scalar_lea.vmem %s818, %s959 [#allocation2]
                  %s962 = scalar_lea.vmem %s829, %s960
                $region79: #{neat_net_forward.1} parent=73 // loop_footer
                  %s918 = sadd.s32 %s916, 1
                $region80: #{neat_net_forward.1} parent=73 // loop_footer_branch
                  %915 = sbr.rel target = $region76
                $region81: #{neat_net_forward.1} parent=73 // loop_exit
                  _
                %s963 = sshrl.u32 %s825, 4
                %s964 = sand.u32 %s825, 15
                %s965 = smul.u32 %s963, 16
                %s966 = smul.u32 8, %s965
                %s967 = scalar_lea.vmem %s818, %s966 [#allocation2]
                %s968 = smul.u32 8, %s965
                %s969 = scalar_lea.vmem %s829, %s968
                // While loop
                $region82: #{neat_net_forward.1} parent=73 // loop_pre_header
                  _
                $region83: #{neat_net_forward.1} parent=73 // loop_header
                  %s971 = sphi 0, %s973
                  %p972 = scmp.ge.s32.totalorder %s971, %s964
                  %s976 = sphi 0, %s983
                  %s977 = sphi %s967, %s986
                  %s978 = sphi %s969, %s987
                $region84: #{neat_net_forward.1} parent=73 // loop_header_branch
                  %975 = sbr.rel (%p972) target = $region88
                $region85: #{neat_net_forward.1} parent=73 // loop_body
                  %v979 = vld [vmem:[%s977] sm:$0xff]
                  %980 = vst [vmem:[%s978] sm:$0xff] %v979
                  %s981 = sadd.s32 1, %s976
                  %p982 = scmp.ge.s32.totalorder %s981, %s964
                  %s983 = scalar_select %p982, 0, %s981
                  %s984 = smul.u32 %s983, 8
                  %s985 = smul.u32 %s983, 8
                  %s986 = scalar_lea.vmem %s967, %s984 [#allocation2]
                  %s987 = scalar_lea.vmem %s969, %s985
                $region86: #{neat_net_forward.1} parent=73 // loop_footer
                  %s973 = sadd.s32 %s971, 1
                $region87: #{neat_net_forward.1} parent=73 // loop_footer_branch
                  %970 = sbr.rel target = $region83
                $region88: #{neat_net_forward.1} parent=73 // loop_exit
                  _
              $region74: #{neat_net_forward.1} parent=51 // pred_fallthru
                _
              // Predicated region
              $region89: #{neat_net_forward.1} parent=51 // pred_check
                _
              $region90: #{neat_net_forward.1} parent=51 // pred_check_branch
                %989 = sbr.rel target = $region92
              $region91: #{neat_net_forward.1} parent=51 // pred_region
                _
              $region92: #{neat_net_forward.1} parent=51 // pred_fallthru
                _
            $region52: #{neat_net_forward.1} parent=47 // pred_fallthru
              _
            // Predicated region
            $region53: #{neat_net_forward.1} parent=47 // pred_check
              _
            $region54: #{neat_net_forward.1} parent=47 // pred_check_branch
              %836 = sbr.rel target = $region56
            $region55: #{neat_net_forward.1} parent=47 // pred_region
              %s838 = sshrl.u32 %s825, 4
              // While loop
              $region57: #{neat_net_forward.1} parent=55 // loop_pre_header
                _
              $region58: #{neat_net_forward.1} parent=55 // loop_header
                %s840 = sphi 0, %s842
                %p841 = scmp.ge.s32.totalorder %s840, %s838
                %s845 = sphi 0, %s882
                %s846 = sphi %s818, %s885
                %s847 = sphi %s829, %s886
              $region59: #{neat_net_forward.1} parent=55 // loop_header_branch
                %844 = sbr.rel (%p841) target = $region63
              $region60: #{neat_net_forward.1} parent=55 // loop_body
                %v848 = vld [vmem:[%s846] sm:$0xff]
                %849 = vst [vmem:[%s847] sm:$0xff] %v848
                %v850 = vld [vmem:[%s846 + $0x8] sm:$0xff]
                %851 = vst [vmem:[%s847 + $0x8] sm:$0xff] %v850
                %v852 = vld [vmem:[%s846 + $0x10] sm:$0xff]
                %853 = vst [vmem:[%s847 + $0x10] sm:$0xff] %v852
                %v854 = vld [vmem:[%s846 + $0x18] sm:$0xff]
                %855 = vst [vmem:[%s847 + $0x18] sm:$0xff] %v854
                %v856 = vld [vmem:[%s846 + $0x20] sm:$0xff]
                %857 = vst [vmem:[%s847 + $0x20] sm:$0xff] %v856
                %v858 = vld [vmem:[%s846 + $0x28] sm:$0xff]
                %859 = vst [vmem:[%s847 + $0x28] sm:$0xff] %v858
                %v860 = vld [vmem:[%s846 + $0x30] sm:$0xff]
                %861 = vst [vmem:[%s847 + $0x30] sm:$0xff] %v860
                %v862 = vld [vmem:[%s846 + $0x38] sm:$0xff]
                %863 = vst [vmem:[%s847 + $0x38] sm:$0xff] %v862
                %v864 = vld [vmem:[%s846 + $0x40] sm:$0xff]
                %865 = vst [vmem:[%s847 + $0x40] sm:$0xff] %v864
                %v866 = vld [vmem:[%s846 + $0x48] sm:$0xff]
                %867 = vst [vmem:[%s847 + $0x48] sm:$0xff] %v866
                %v868 = vld [vmem:[%s846 + $0x50] sm:$0xff]
                %869 = vst [vmem:[%s847 + $0x50] sm:$0xff] %v868
                %v870 = vld [vmem:[%s846 + $0x58] sm:$0xff]
                %871 = vst [vmem:[%s847 + $0x58] sm:$0xff] %v870
                %v872 = vld [vmem:[%s846 + $0x60] sm:$0xff]
                %873 = vst [vmem:[%s847 + $0x60] sm:$0xff] %v872
                %v874 = vld [vmem:[%s846 + $0x68] sm:$0xff]
                %875 = vst [vmem:[%s847 + $0x68] sm:$0xff] %v874
                %v876 = vld [vmem:[%s846 + $0x70] sm:$0xff]
                %877 = vst [vmem:[%s847 + $0x70] sm:$0xff] %v876
                %v878 = vld [vmem:[%s846 + $0x78] sm:$0xff]
                %879 = vst [vmem:[%s847 + $0x78] sm:$0xff] %v878
                %s880 = sadd.s32 1, %s845
                %p881 = scmp.ge.s32.totalorder %s880, %s838
                %s882 = scalar_select %p881, 0, %s880
                %s883 = smul.u32 %s882, 128
                %s884 = smul.u32 %s882, 128
                %s885 = scalar_lea.vmem %s818, %s883 [#allocation2]
                %s886 = scalar_lea.vmem %s829, %s884
              $region61: #{neat_net_forward.1} parent=55 // loop_footer
                %s842 = sadd.s32 %s840, 1
              $region62: #{neat_net_forward.1} parent=55 // loop_footer_branch
                %839 = sbr.rel target = $region58
              $region63: #{neat_net_forward.1} parent=55 // loop_exit
                _
              %s887 = sshrl.u32 %s825, 4
              %s888 = sand.u32 %s825, 15
              %s889 = smul.u32 %s887, 16
              %s890 = smul.u32 8, %s889
              %s891 = scalar_lea.vmem %s818, %s890 [#allocation2]
              %s892 = smul.u32 8, %s889
              %s893 = scalar_lea.vmem %s829, %s892
              // While loop
              $region64: #{neat_net_forward.1} parent=55 // loop_pre_header
                _
              $region65: #{neat_net_forward.1} parent=55 // loop_header
                %s895 = sphi 0, %s897
                %p896 = scmp.ge.s32.totalorder %s895, %s888
                %s900 = sphi 0, %s907
                %s901 = sphi %s891, %s910
                %s902 = sphi %s893, %s911
              $region66: #{neat_net_forward.1} parent=55 // loop_header_branch
                %899 = sbr.rel (%p896) target = $region70
              $region67: #{neat_net_forward.1} parent=55 // loop_body
                %v903 = vld [vmem:[%s901] sm:$0xff]
                %904 = vst [vmem:[%s902] sm:$0xff] %v903
                %s905 = sadd.s32 1, %s900
                %p906 = scmp.ge.s32.totalorder %s905, %s888
                %s907 = scalar_select %p906, 0, %s905
                %s908 = smul.u32 %s907, 8
                %s909 = smul.u32 %s907, 8
                %s910 = scalar_lea.vmem %s891, %s908 [#allocation2]
                %s911 = scalar_lea.vmem %s893, %s909
              $region68: #{neat_net_forward.1} parent=55 // loop_footer
                %s897 = sadd.s32 %s895, 1
              $region69: #{neat_net_forward.1} parent=55 // loop_footer_branch
                %894 = sbr.rel target = $region65
              $region70: #{neat_net_forward.1} parent=55 // loop_exit
                _
            $region56: #{neat_net_forward.1} parent=47 // pred_fallthru
              _
          $region48: #{neat_net_forward.1} parent=43 // pred_fallthru
            _
          %990 = vnop
        $region44: #{neat_net_forward.1} parent=39 // pred_fallthru
          _
      $region40: #{neat_net_forward.1} parent=5 // pred_fallthru
        _
      %p991 = scmp.le.s32.totalorder 2, %s11
      // Predicated region
      $region93: #{neat_net_forward.1} parent=5 // pred_check
        %p992 = pneg %p991
      $region94: #{neat_net_forward.1} parent=5 // pred_check_branch
        %994 = sbr.rel (%p992) target = $region96
      $region95: #{neat_net_forward.1} parent=5 // pred_region
        %s995 = ssub.s32 %s11, 2
        // Predicated region
        $region97: #{neat_net_forward.1} parent=95 // pred_check
          %p996 = pneg %p150
        $region98: #{neat_net_forward.1} parent=95 // pred_check_branch
          %998 = sbr.rel (%p996) target = $region100
        $region99: #{neat_net_forward.1} parent=95 // pred_region
          %s999 = sand.u32 %s135, 1
          %s1000 = sand.u32 %s135, 1
          %s1001 = smul.addr %s1000, 128
          %s1002 = scalar_lea.vmem [#allocation2], %s1001
        $region100: #{neat_net_forward.1} parent=95 // pred_fallthru
          _
      $region96: #{neat_net_forward.1} parent=5 // pred_fallthru
        _
    $region6: #{neat_net_forward.1} parent=1 // loop_footer
      %s15 = sadd.s32 1, %s11
    $region7: #{neat_net_forward.1} parent=1 // loop_footer_branch
      %10 = sbr.rel target = $region3
    $region8: #{neat_net_forward.1} parent=1 // loop_exit
      _

</llo_original>
